<compile_context>
chip_gen: v7x
topology: tpu7x:2x2x1
jax: 0.10.0
libtpu: 0.0.40
codegen_flags: <defaults>
</compile_context>

<pallas_src>
import jax
import jax.numpy as jnp
from jax.experimental import pallas as pl
from jax.experimental.pallas import tpu as pltpu

IN_F = 16
HID_F = 32
OUT_F = 2
PACK = 128        # samples packed per lane-dense row (one vreg lane width)
MAX_TBB = 128     # packed rows per grid step -> 128*128 = 16384 samples,
                  # 1 MiB f32 x-tile (knee of the measured tiling roofline)


def net_kernel(x_ref, w_ref, b_ref, o_ref):
    # x_ref: (TBB, PACK*IN_F)  -- 128 samples per row, 16 features each
    # w_ref: (PACK*IN_F, PACK) -- block-diagonal folded weight (grid-resident)
    # b_ref: (1, PACK)         -- folded bias broadcast over lanes (resident)
    # o_ref: (TBB, PACK)       -- one scalar per sample, lane-dense store
    o_ref[...] = (
        jnp.dot(x_ref[...], w_ref[...], preferred_element_type=jnp.float32)
        + b_ref[...]
    )


def net_forward(x, w1, b1, w2, b2):
    """x: (B, 16) f32. Weights pre-transposed: w1 (16,32), b1 (1,32),
    w2 (32,2), b2 (1,2). Returns (B,) = mean(fc2(fc1(x)), axis=1)."""
    B = x.shape[0]

    # --- algebraic collapse of the whole network (exact: no nonlinearity) ---
    v = jnp.mean(w2, axis=1)                        # (32,)  mean over 2 outputs
    w_eff = w1 @ v                                  # (16,)
    b_eff = b1[0] @ v + jnp.mean(b2)                # scalar

    # --- lane-dense repack of the batch -------------------------------------
    nb = pl.cdiv(B, PACK)                           # packed rows needed
    tbb = MAX_TBB if nb >= MAX_TBB else nb          # packed rows per grid step
    nb_pad = pl.cdiv(nb, tbb) * tbb
    bp = nb_pad * PACK                              # padded batch
    if bp != B:
        x = jnp.pad(x, ((0, bp - B), (0, 0)))
    x2 = x.reshape(nb_pad, PACK * IN_F)             # 128 samples per row

    # Block-diagonal folded weight: w_bd[j*IN_F + k, j] = w_eff[k]
    eye = jnp.eye(PACK, dtype=jnp.float32)
    w_bd = (eye[:, None, :] * w_eff[None, :, None]).reshape(PACK * IN_F, PACK)
    b_vec = jnp.full((1, PACK), b_eff, dtype=jnp.float32)

    grid = (nb_pad // tbb,)
    cost = pl.CostEstimate(
        flops=2 * nb_pad * (PACK * IN_F) * PACK,
        transcendentals=0,
        bytes_accessed=int(
            bp * IN_F * 4            # x
            + PACK * IN_F * PACK * 4  # folded weight (read once, resident)
            + PACK * 4                # bias
            + bp * 4                  # output
        ),
    )

    out = pl.pallas_call(
        net_kernel,
        out_shape=jax.ShapeDtypeStruct((nb_pad, PACK), jnp.float32),
        grid=grid,
        in_specs=[
            pl.BlockSpec((tbb, PACK * IN_F), lambda i: (i, 0)),     # x tiles
            pl.BlockSpec((PACK * IN_F, PACK), lambda i: (0, 0)),    # resident W
            pl.BlockSpec((1, PACK), lambda i: (0, 0)),              # resident b
        ],
        out_specs=pl.BlockSpec((tbb, PACK), lambda i: (i, 0)),
        compiler_params=pltpu.CompilerParams(
            dimension_semantics=("parallel",),      # shard batch over 2 TCs on v7x
        ),
        cost_estimate=cost,
    )(x2, w_bd, b_vec)

    # (nb_pad, 128) row-major == flat padded batch order; drop padding rows.
    return out.reshape(bp)[:B]


def init_params(key):
    k1, k2, k3, k4 = jax.random.split(key, 4)
    # Mimic nn.Linear's uniform(-1/sqrt(fan_in), 1/sqrt(fan_in)) init.
    bound1 = 1.0 / (IN_F ** 0.5)
    bound2 = 1.0 / (HID_F ** 0.5)
    # Stored as (in, out) == transpose of torch's (out, in) weight.
    w1 = jax.random.uniform(k1, (IN_F, HID_F), jnp.float32, -bound1, bound1)
    b1 = jax.random.uniform(k2, (1, HID_F), jnp.float32, -bound1, bound1)
    w2 = jax.random.uniform(k3, (HID_F, OUT_F), jnp.float32, -bound2, bound2)
    b2 = jax.random.uniform(k4, (1, OUT_F), jnp.float32, -bound2, bound2)
    return w1, b1, w2, b2


if __name__ == "__main__":
    key = jax.random.PRNGKey(0)
    k_x, k_p = jax.random.split(key)

    B = 8
    x = jax.random.normal(k_x, (B, IN_F), jnp.float32)
    w1, b1, w2, b2 = init_params(k_p)

    out = net_forward(x, w1, b1, w2, b2)
    out = jax.block_until_ready(out)

    # Reference: the original (un-collapsed) forward in plain JAX.
    ref = jnp.mean((x @ w1 + b1) @ w2 + b2, axis=1)
    assert out.shape == (B,)
    assert jnp.allclose(out, ref, atol=1e-5, rtol=1e-5)

    # Larger, non-aligned batch to exercise padding + multi-tile grid path.
    B2 = 300
    x2 = jax.random.normal(k_x, (B2, IN_F), jnp.float32)
    out2 = jax.block_until_ready(net_forward(x2, w1, b1, w2, b2))
    ref2 = jnp.mean((x2 @ w1 + b1) @ w2 + b2, axis=1)
    assert out2.shape == (B2,)
    assert jnp.allclose(out2, ref2, atol=1e-5, rtol=1e-5)

    print("KERNEL_OK")
</pallas_src>

<mosaic_0001>
module attributes {stable_mosaic.version = 11 : i64} {
  func.func @net_kernel(%arg0: i32, %arg1: memref<1x2048xf32, #tpu.memory_space<vmem>>, %arg2: memref<2048x128xf32, #tpu.memory_space<vmem>>, %arg3: memref<1x128xf32, #tpu.memory_space<vmem>>, %arg4: memref<1x128xf32, #tpu.memory_space<vmem>>) attributes {dimension_semantics = [#tpu.dimension_semantics<parallel>], iteration_bounds = array<i64: 1>, scalar_prefetch = 0 : i64, scratch_operands = 0 : i64, tpu.core_type = #tpu.core_type<tc>, window_params = [{transform_indices = @transform_0, window_bounds = array<i64: 1, 2048>}, {pipeline_mode = #tpu.pipeline_mode<synchronous>, transform_indices = @transform_1, window_bounds = array<i64: 2048, 128>}, {pipeline_mode = #tpu.pipeline_mode<synchronous>, transform_indices = @transform_2, window_bounds = array<i64: 1, 128>}, {transform_indices = @transform_3, window_bounds = array<i64: 1, 128>}]} {
    %c0 = arith.constant 0 : index
    %c0_0 = arith.constant 0 : index
    %0 = vector.load %arg1[%c0, %c0_0] : memref<1x2048xf32, #tpu.memory_space<vmem>>, vector<1x2048xf32>
    %c0_1 = arith.constant 0 : index
    %c0_2 = arith.constant 0 : index
    %1 = vector.load %arg2[%c0_1, %c0_2] : memref<2048x128xf32, #tpu.memory_space<vmem>>, vector<2048x128xf32>
    %cst = arith.constant dense<0.000000e+00> : vector<1x128xf32>
    %2 = tpu.matmul %0, %1, %cst {dimension_numbers = #tpu.dot_dimension_numbers<[1], [0], [0], [1], [0, 0, 1, 1], [], []>} : vector<1x2048xf32>, vector<2048x128xf32>, vector<1x128xf32> -> vector<1x128xf32>
    %c0_3 = arith.constant 0 : index
    %c0_4 = arith.constant 0 : index
    %3 = vector.load %arg3[%c0_3, %c0_4] : memref<1x128xf32, #tpu.memory_space<vmem>>, vector<1x128xf32>
    %4 = arith.addf %2, %3 : vector<1x128xf32>
    %c0_5 = arith.constant 0 : index
    %c0_6 = arith.constant 0 : index
    %5 = vector.load %arg4[%c0_5, %c0_6] : memref<1x128xf32, #tpu.memory_space<vmem>>, vector<1x128xf32>
    tpu.vector_store %arg4[%c0_5, %c0_6], %4 {strides = array<i32>} : memref<1x128xf32, #tpu.memory_space<vmem>>, vector<1x128xf32>,
    return
  }
  func.func @transform_0(%arg0: i32) -> (i32, i32) {
    %c0_i32 = arith.constant 0 : i32
    %c0_i32_0 = arith.constant 0 : i32
    return %arg0, %c0_i32 : i32, i32
  }
  func.func @transform_1(%arg0: i32) -> (i32, i32) {
    %c0_i32 = arith.constant 0 : i32
    %c0_i32_0 = arith.constant 0 : i32
    %c0_i32_1 = arith.constant 0 : i32
    return %c0_i32, %c0_i32_0 : i32, i32
  }
  func.func @transform_2(%arg0: i32) -> (i32, i32) {
    %c0_i32 = arith.constant 0 : i32
    %c0_i32_0 = arith.constant 0 : i32
    %c0_i32_1 = arith.constant 0 : i32
    return %c0_i32, %c0_i32_0 : i32, i32
  }
  func.func @transform_3(%arg0: i32) -> (i32, i32) {
    %c0_i32 = arith.constant 0 : i32
    %c0_i32_0 = arith.constant 0 : i32
    return %arg0, %c0_i32 : i32, i32
  }
}

</mosaic_0001>

<llo_original>
// kernel: tpu_custom_call.1
$region0: #{tpu_custom_call.1}
  #allocation0 [shape = 'u32[]', space=smem, size = 0x4, offset = 0x4, fixed_abs, tag = 'smem constant byte address 0x4 - core index']
  #allocation1 [shape = 'u32[144,128]{1,0:T(1,128)}', space=vmem, size = 0x12000, scoped, tag = 'internal scratch']
  %s0 = inlined_call_operand.hbm [shape: f32[1,2048], index: 0, kind: input, shape index: {}]
  %s1 = inlined_call_operand.hbm [shape: f32[2048,128], index: 1, kind: input, shape index: {}]
  %s2 = inlined_call_operand.vmem [shape: f32[1,128], index: 2, kind: input, shape index: {}]
  %s3 = inlined_call_operand.hbm [shape: f32[1,128], index: 3, kind: output, shape index: {}]
  %s4 = sld [smem:[#allocation0]]
  $region30: #{tpu_custom_call.1} parent=0
    _
  %s6 = ssub.s32 1, %s4
  %s7 = scalar_select 0, %s6, %s4
  $region1: #{tpu_custom_call.1} parent=0
    #allocation2 [shape = 'u8[8192]{0}', space=vmem, size = 0x2000, scoped, tag = 'input window, operand 0, single buffered']
    #allocation3 [shape = 's32[1]{0}', space=sflag, size = 0x4, scoped, tag = 'scoped memory for tpu_custom_call.1']
    #allocation4 [shape = 's32[1]{0}', space=sflag, size = 0x4, scoped, tag = 'scoped memory for tpu_custom_call.1']
    #allocation5 [shape = 'u8[1048576]{0}', space=vmem, size = 0x100000, scoped, tag = 'input window, operand 1, single buffered']
    #allocation6 [shape = 's32[1]{0}', space=sflag, size = 0x4, scoped, tag = 'scoped memory for tpu_custom_call.1']
    #allocation7 [shape = 'u8[512]{0}', space=vmem, size = 0x400, scoped, tag = 'output window, operand 0, single buffered']
    %8 = vsyncpa [#allocation3], 0
    %9 = vsyncpa [#allocation6], 0
    %10 = vsyncpa [#allocation4], 0
    // Predicated region
    $region2: #{tpu_custom_call.1} parent=1 // pred_check
      _
    $region3: #{tpu_custom_call.1} parent=1 // pred_check_branch
      %12 = sbr.rel (0) target = $region5
    $region4: #{tpu_custom_call.1} parent=1 // pred_region
      %s14 = ssub.s32 256, 256
      %15 = vsyncadd [#allocation3], %s14
      %s17 = sshll.u32 [#allocation2], 4
      %s18 = int_to_ptr.vmem [resolvable:$true] %s17
      %20 = dma.hbm_to_vmem [thread:$0]  %s0, 256, %s18, [#allocation3]
    $region5: #{tpu_custom_call.1} parent=1 // pred_fallthru
      _
    // Predicated region
    $region6: #{tpu_custom_call.1} parent=1 // pred_check
      _
    $region7: #{tpu_custom_call.1} parent=1 // pred_check_branch
      %22 = sbr.rel (0) target = $region9
    $region8: #{tpu_custom_call.1} parent=1 // pred_region
      %s24 = ssub.s32 32768, 32768
      %25 = vsyncadd [#allocation6], %s24
      %s26 = sshll.u32 [#allocation5], 4
      %s27 = int_to_ptr.vmem [resolvable:$true] %s26
      %32 = dma.hbm_to_vmem [thread:$0]  %s1, 32768, %s27, [#allocation6], 128, 128, 8
    $region9: #{tpu_custom_call.1} parent=1 // pred_fallthru
      _
    // Predicated region
    $region10: #{tpu_custom_call.1} parent=1 // pred_check
      _
    $region11: #{tpu_custom_call.1} parent=1 // pred_check_branch
      %34 = sbr.rel (0) target = $region13
    $region12: #{tpu_custom_call.1} parent=1 // pred_region
      _
    $region13: #{tpu_custom_call.1} parent=1 // pred_fallthru
      _
    // Predicated region
    $region14: #{tpu_custom_call.1} parent=1 // pred_check
      _
    $region15: #{tpu_custom_call.1} parent=1 // pred_check_branch
      %36 = sbr.rel (0) target = $region17
    $region16: #{tpu_custom_call.1} parent=1 // pred_region
      %37 = dma.done [#allocation3], 256
    $region17: #{tpu_custom_call.1} parent=1 // pred_fallthru
      _
    // Predicated region
    $region18: #{tpu_custom_call.1} parent=1 // pred_check
      _
    $region19: #{tpu_custom_call.1} parent=1 // pred_check_branch
      %39 = sbr.rel (0) target = $region21
    $region20: #{tpu_custom_call.1} parent=1 // pred_region
      %40 = dma.done [#allocation6], 32768
    $region21: #{tpu_custom_call.1} parent=1 // pred_fallthru
      _
    %v41 = vld [vmem:[#allocation2] sm:$0xff]
    %v42 = vld [vmem:[#allocation2 + $0x8] sm:$0xff]
    %v43 = vld [vmem:[#allocation5] sm:$0xff]
    %v44 = vld [vmem:[#allocation5 + $0x8] sm:$0xff]
    %v45 = vld [vmem:[#allocation5 + $0x10] sm:$0xff]
    %v46 = vld [vmem:[#allocation5 + $0x18] sm:$0xff]
    %v47 = vld [vmem:[#allocation5 + $0x20] sm:$0xff]
    %v48 = vld [vmem:[#allocation5 + $0x28] sm:$0xff]
    %v49 = vld [vmem:[#allocation5 + $0x30] sm:$0xff]
    %v50 = vld [vmem:[#allocation5 + $0x38] sm:$0xff]
    %v51 = vld [vmem:[#allocation5 + $0x40] sm:$0xff]
    %v52 = vld [vmem:[#allocation5 + $0x48] sm:$0xff]
    %v53 = vld [vmem:[#allocation5 + $0x50] sm:$0xff]
    %v54 = vld [vmem:[#allocation5 + $0x58] sm:$0xff]
    %v55 = vld [vmem:[#allocation5 + $0x60] sm:$0xff]
    %v56 = vld [vmem:[#allocation5 + $0x68] sm:$0xff]
    %v57 = vld [vmem:[#allocation5 + $0x70] sm:$0xff]
    %v58 = vld [vmem:[#allocation5 + $0x78] sm:$0xff]
    %v59 = vld [vmem:[#allocation5 + $0x80] sm:$0xff]
    %v60 = vld [vmem:[#allocation5 + $0x88] sm:$0xff]
    %v61 = vld [vmem:[#allocation5 + $0x90] sm:$0xff]
    %v62 = vld [vmem:[#allocation5 + $0x98] sm:$0xff]
    %v63 = vld [vmem:[#allocation5 + $0xa0] sm:$0xff]
    %v64 = vld [vmem:[#allocation5 + $0xa8] sm:$0xff]
    %v65 = vld [vmem:[#allocation5 + $0xb0] sm:$0xff]
    %v66 = vld [vmem:[#allocation5 + $0xb8] sm:$0xff]
    %v67 = vld [vmem:[#allocation5 + $0xc0] sm:$0xff]
    %v68 = vld [vmem:[#allocation5 + $0xc8] sm:$0xff]
    %v69 = vld [vmem:[#allocation5 + $0xd0] sm:$0xff]
    %v70 = vld [vmem:[#allocation5 + $0xd8] sm:$0xff]
    %v71 = vld [vmem:[#allocation5 + $0xe0] sm:$0xff]
    %v72 = vld [vmem:[#allocation5 + $0xe8] sm:$0xff]
    %v73 = vld [vmem:[#allocation5 + $0xf0] sm:$0xff]
    %v74 = vld [vmem:[#allocation5 + $0xf8] sm:$0xff]
    %v75 = vld [vmem:[#allocation5 + $0x100] sm:$0xff]
    %v76 = vld [vmem:[#allocation5 + $0x108] sm:$0xff]
    %v77 = vld [vmem:[#allocation5 + $0x110] sm:$0xff]
    %v78 = vld [vmem:[#allocation5 + $0x118] sm:$0xff]
    %v79 = vld [vmem:[#allocation5 + $0x120] sm:$0xff]
    %v80 = vld [vmem:[#allocation5 + $0x128] sm:$0xff]
    %v81 = vld [vmem:[#allocation5 + $0x130] sm:$0xff]
    %v82 = vld [vmem:[#allocation5 + $0x138] sm:$0xff]
    %v83 = vld [vmem:[#allocation5 + $0x140] sm:$0xff]
    %v84 = vld [vmem:[#allocation5 + $0x148] sm:$0xff]
    %v85 = vld [vmem:[#allocation5 + $0x150] sm:$0xff]
    %v86 = vld [vmem:[#allocation5 + $0x158] sm:$0xff]
    %v87 = vld [vmem:[#allocation5 + $0x160] sm:$0xff]
    %v88 = vld [vmem:[#allocation5 + $0x168] sm:$0xff]
    %v89 = vld [vmem:[#allocation5 + $0x170] sm:$0xff]
    %v90 = vld [vmem:[#allocation5 + $0x178] sm:$0xff]
    %v91 = vld [vmem:[#allocation5 + $0x180] sm:$0xff]
    %v92 = vld [vmem:[#allocation5 + $0x188] sm:$0xff]
    %v93 = vld [vmem:[#allocation5 + $0x190] sm:$0xff]
    %v94 = vld [vmem:[#allocation5 + $0x198] sm:$0xff]
    %v95 = vld [vmem:[#allocation5 + $0x1a0] sm:$0xff]
    %v96 = vld [vmem:[#allocation5 + $0x1a8] sm:$0xff]
    %v97 = vld [vmem:[#allocation5 + $0x1b0] sm:$0xff]
    %v98 = vld [vmem:[#allocation5 + $0x1b8] sm:$0xff]
    %v99 = vld [vmem:[#allocation5 + $0x1c0] sm:$0xff]
    %v100 = vld [vmem:[#allocation5 + $0x1c8] sm:$0xff]
    %v101 = vld [vmem:[#allocation5 + $0x1d0] sm:$0xff]
    %v102 = vld [vmem:[#allocation5 + $0x1d8] sm:$0xff]
    %v103 = vld [vmem:[#allocation5 + $0x1e0] sm:$0xff]
    %v104 = vld [vmem:[#allocation5 + $0x1e8] sm:$0xff]
    %v105 = vld [vmem:[#allocation5 + $0x1f0] sm:$0xff]
    %v106 = vld [vmem:[#allocation5 + $0x1f8] sm:$0xff]
    %v107 = vld [vmem:[#allocation5 + $0x200] sm:$0xff]
    %v108 = vld [vmem:[#allocation5 + $0x208] sm:$0xff]
    %v109 = vld [vmem:[#allocation5 + $0x210] sm:$0xff]
    %v110 = vld [vmem:[#allocation5 + $0x218] sm:$0xff]
    %v111 = vld [vmem:[#allocation5 + $0x220] sm:$0xff]
    %v112 = vld [vmem:[#allocation5 + $0x228] sm:$0xff]
    %v113 = vld [vmem:[#allocation5 + $0x230] sm:$0xff]
    %v114 = vld [vmem:[#allocation5 + $0x238] sm:$0xff]
    %v115 = vld [vmem:[#allocation5 + $0x240] sm:$0xff]
    %v116 = vld [vmem:[#allocation5 + $0x248] sm:$0xff]
    %v117 = vld [vmem:[#allocation5 + $0x250] sm:$0xff]
    %v118 = vld [vmem:[#allocation5 + $0x258] sm:$0xff]
    %v119 = vld [vmem:[#allocation5 + $0x260] sm:$0xff]
    %v120 = vld [vmem:[#allocation5 + $0x268] sm:$0xff]
    %v121 = vld [vmem:[#allocation5 + $0x270] sm:$0xff]
    %v122 = vld [vmem:[#allocation5 + $0x278] sm:$0xff]
    %v123 = vld [vmem:[#allocation5 + $0x280] sm:$0xff]
    %v124 = vld [vmem:[#allocation5 + $0x288] sm:$0xff]
    %v125 = vld [vmem:[#allocation5 + $0x290] sm:$0xff]
    %v126 = vld [vmem:[#allocation5 + $0x298] sm:$0xff]
    %v127 = vld [vmem:[#allocation5 + $0x2a0] sm:$0xff]
    %v128 = vld [vmem:[#allocation5 + $0x2a8] sm:$0xff]
    %v129 = vld [vmem:[#allocation5 + $0x2b0] sm:$0xff]
    %v130 = vld [vmem:[#allocation5 + $0x2b8] sm:$0xff]
    %v131 = vld [vmem:[#allocation5 + $0x2c0] sm:$0xff]
    %v132 = vld [vmem:[#allocation5 + $0x2c8] sm:$0xff]
    %v133 = vld [vmem:[#allocation5 + $0x2d0] sm:$0xff]
    %v134 = vld [vmem:[#allocation5 + $0x2d8] sm:$0xff]
    %v135 = vld [vmem:[#allocation5 + $0x2e0] sm:$0xff]
    %v136 = vld [vmem:[#allocation5 + $0x2e8] sm:$0xff]
    %v137 = vld [vmem:[#allocation5 + $0x2f0] sm:$0xff]
    %v138 = vld [vmem:[#allocation5 + $0x2f8] sm:$0xff]
    %v139 = vld [vmem:[#allocation5 + $0x300] sm:$0xff]
    %v140 = vld [vmem:[#allocation5 + $0x308] sm:$0xff]
    %v141 = vld [vmem:[#allocation5 + $0x310] sm:$0xff]
    %v142 = vld [vmem:[#allocation5 + $0x318] sm:$0xff]
    %v143 = vld [vmem:[#allocation5 + $0x320] sm:$0xff]
    %v144 = vld [vmem:[#allocation5 + $0x328] sm:$0xff]
    %v145 = vld [vmem:[#allocation5 + $0x330] sm:$0xff]
    %v146 = vld [vmem:[#allocation5 + $0x338] sm:$0xff]
    %v147 = vld [vmem:[#allocation5 + $0x340] sm:$0xff]
    %v148 = vld [vmem:[#allocation5 + $0x348] sm:$0xff]
    %v149 = vld [vmem:[#allocation5 + $0x350] sm:$0xff]
    %v150 = vld [vmem:[#allocation5 + $0x358] sm:$0xff]
    %v151 = vld [vmem:[#allocation5 + $0x360] sm:$0xff]
    %v152 = vld [vmem:[#allocation5 + $0x368] sm:$0xff]
    %v153 = vld [vmem:[#allocation5 + $0x370] sm:$0xff]
    %v154 = vld [vmem:[#allocation5 + $0x378] sm:$0xff]
    %v155 = vld [vmem:[#allocation5 + $0x380] sm:$0xff]
    %v156 = vld [vmem:[#allocation5 + $0x388] sm:$0xff]
    %v157 = vld [vmem:[#allocation5 + $0x390] sm:$0xff]
    %v158 = vld [vmem:[#allocation5 + $0x398] sm:$0xff]
    %v159 = vld [vmem:[#allocation5 + $0x3a0] sm:$0xff]
    %v160 = vld [vmem:[#allocation5 + $0x3a8] sm:$0xff]
    %v161 = vld [vmem:[#allocation5 + $0x3b0] sm:$0xff]
    %v162 = vld [vmem:[#allocation5 + $0x3b8] sm:$0xff]
    %v163 = vld [vmem:[#allocation5 + $0x3c0] sm:$0xff]
    %v164 = vld [vmem:[#allocation5 + $0x3c8] sm:$0xff]
    %v165 = vld [vmem:[#allocation5 + $0x3d0] sm:$0xff]
    %v166 = vld [vmem:[#allocation5 + $0x3d8] sm:$0xff]
    %v167 = vld [vmem:[#allocation5 + $0x3e0] sm:$0xff]
    %v168 = vld [vmem:[#allocation5 + $0x3e8] sm:$0xff]
    %v169 = vld [vmem:[#allocation5 + $0x3f0] sm:$0xff]
    %v170 = vld [vmem:[#allocation5 + $0x3f8] sm:$0xff]
    %v171 = vld [vmem:[#allocation5 + $0x400] sm:$0xff]
    %v172 = vld [vmem:[#allocation5 + $0x408] sm:$0xff]
    %v173 = vld [vmem:[#allocation5 + $0x410] sm:$0xff]
    %v174 = vld [vmem:[#allocation5 + $0x418] sm:$0xff]
    %v175 = vld [vmem:[#allocation5 + $0x420] sm:$0xff]
    %v176 = vld [vmem:[#allocation5 + $0x428] sm:$0xff]
    %v177 = vld [vmem:[#allocation5 + $0x430] sm:$0xff]
    %v178 = vld [vmem:[#allocation5 + $0x438] sm:$0xff]
    %v179 = vld [vmem:[#allocation5 + $0x440] sm:$0xff]
    %v180 = vld [vmem:[#allocation5 + $0x448] sm:$0xff]
    %v181 = vld [vmem:[#allocation5 + $0x450] sm:$0xff]
    %v182 = vld [vmem:[#allocation5 + $0x458] sm:$0xff]
    %v183 = vld [vmem:[#allocation5 + $0x460] sm:$0xff]
    %v184 = vld [vmem:[#allocation5 + $0x468] sm:$0xff]
    %v185 = vld [vmem:[#allocation5 + $0x470] sm:$0xff]
    %v186 = vld [vmem:[#allocation5 + $0x478] sm:$0xff]
    %v187 = vld [vmem:[#allocation5 + $0x480] sm:$0xff]
    %v188 = vld [vmem:[#allocation5 + $0x488] sm:$0xff]
    %v189 = vld [vmem:[#allocation5 + $0x490] sm:$0xff]
    %v190 = vld [vmem:[#allocation5 + $0x498] sm:$0xff]
    %v191 = vld [vmem:[#allocation5 + $0x4a0] sm:$0xff]
    %v192 = vld [vmem:[#allocation5 + $0x4a8] sm:$0xff]
    %v193 = vld [vmem:[#allocation5 + $0x4b0] sm:$0xff]
    %v194 = vld [vmem:[#allocation5 + $0x4b8] sm:$0xff]
    %v195 = vld [vmem:[#allocation5 + $0x4c0] sm:$0xff]
    %v196 = vld [vmem:[#allocation5 + $0x4c8] sm:$0xff]
    %v197 = vld [vmem:[#allocation5 + $0x4d0] sm:$0xff]
    %v198 = vld [vmem:[#allocation5 + $0x4d8] sm:$0xff]
    %v199 = vld [vmem:[#allocation5 + $0x4e0] sm:$0xff]
    %v200 = vld [vmem:[#allocation5 + $0x4e8] sm:$0xff]
    %v201 = vld [vmem:[#allocation5 + $0x4f0] sm:$0xff]
    %v202 = vld [vmem:[#allocation5 + $0x4f8] sm:$0xff]
    %v203 = vld [vmem:[#allocation5 + $0x500] sm:$0xff]
    %v204 = vld [vmem:[#allocation5 + $0x508] sm:$0xff]
    %v205 = vld [vmem:[#allocation5 + $0x510] sm:$0xff]
    %v206 = vld [vmem:[#allocation5 + $0x518] sm:$0xff]
    %v207 = vld [vmem:[#allocation5 + $0x520] sm:$0xff]
    %v208 = vld [vmem:[#allocation5 + $0x528] sm:$0xff]
    %v209 = vld [vmem:[#allocation5 + $0x530] sm:$0xff]
    %v210 = vld [vmem:[#allocation5 + $0x538] sm:$0xff]
    %v211 = vld [vmem:[#allocation5 + $0x540] sm:$0xff]
    %v212 = vld [vmem:[#allocation5 + $0x548] sm:$0xff]
    %v213 = vld [vmem:[#allocation5 + $0x550] sm:$0xff]
    %v214 = vld [vmem:[#allocation5 + $0x558] sm:$0xff]
    %v215 = vld [vmem:[#allocation5 + $0x560] sm:$0xff]
    %v216 = vld [vmem:[#allocation5 + $0x568] sm:$0xff]
    %v217 = vld [vmem:[#allocation5 + $0x570] sm:$0xff]
    %v218 = vld [vmem:[#allocation5 + $0x578] sm:$0xff]
    %v219 = vld [vmem:[#allocation5 + $0x580] sm:$0xff]
    %v220 = vld [vmem:[#allocation5 + $0x588] sm:$0xff]
    %v221 = vld [vmem:[#allocation5 + $0x590] sm:$0xff]
    %v222 = vld [vmem:[#allocation5 + $0x598] sm:$0xff]
    %v223 = vld [vmem:[#allocation5 + $0x5a0] sm:$0xff]
    %v224 = vld [vmem:[#allocation5 + $0x5a8] sm:$0xff]
    %v225 = vld [vmem:[#allocation5 + $0x5b0] sm:$0xff]
    %v226 = vld [vmem:[#allocation5 + $0x5b8] sm:$0xff]
    %v227 = vld [vmem:[#allocation5 + $0x5c0] sm:$0xff]
    %v228 = vld [vmem:[#allocation5 + $0x5c8] sm:$0xff]
    %v229 = vld [vmem:[#allocation5 + $0x5d0] sm:$0xff]
    %v230 = vld [vmem:[#allocation5 + $0x5d8] sm:$0xff]
    %v231 = vld [vmem:[#allocation5 + $0x5e0] sm:$0xff]
    %v232 = vld [vmem:[#allocation5 + $0x5e8] sm:$0xff]
    %v233 = vld [vmem:[#allocation5 + $0x5f0] sm:$0xff]
    %v234 = vld [vmem:[#allocation5 + $0x5f8] sm:$0xff]
    %v235 = vld [vmem:[#allocation5 + $0x600] sm:$0xff]
    %v236 = vld [vmem:[#allocation5 + $0x608] sm:$0xff]
    %v237 = vld [vmem:[#allocation5 + $0x610] sm:$0xff]
    %v238 = vld [vmem:[#allocation5 + $0x618] sm:$0xff]
    %v239 = vld [vmem:[#allocation5 + $0x620] sm:$0xff]
    %v240 = vld [vmem:[#allocation5 + $0x628] sm:$0xff]
    %v241 = vld [vmem:[#allocation5 + $0x630] sm:$0xff]
    %v242 = vld [vmem:[#allocation5 + $0x638] sm:$0xff]
    %v243 = vld [vmem:[#allocation5 + $0x640] sm:$0xff]
    %v244 = vld [vmem:[#allocation5 + $0x648] sm:$0xff]
    %v245 = vld [vmem:[#allocation5 + $0x650] sm:$0xff]
    %v246 = vld [vmem:[#allocation5 + $0x658] sm:$0xff]
    %v247 = vld [vmem:[#allocation5 + $0x660] sm:$0xff]
    %v248 = vld [vmem:[#allocation5 + $0x668] sm:$0xff]
    %v249 = vld [vmem:[#allocation5 + $0x670] sm:$0xff]
    %v250 = vld [vmem:[#allocation5 + $0x678] sm:$0xff]
    %v251 = vld [vmem:[#allocation5 + $0x680] sm:$0xff]
    %v252 = vld [vmem:[#allocation5 + $0x688] sm:$0xff]
    %v253 = vld [vmem:[#allocation5 + $0x690] sm:$0xff]
    %v254 = vld [vmem:[#allocation5 + $0x698] sm:$0xff]
    %v255 = vld [vmem:[#allocation5 + $0x6a0] sm:$0xff]
    %v256 = vld [vmem:[#allocation5 + $0x6a8] sm:$0xff]
    %v257 = vld [vmem:[#allocation5 + $0x6b0] sm:$0xff]
    %v258 = vld [vmem:[#allocation5 + $0x6b8] sm:$0xff]
    %v259 = vld [vmem:[#allocation5 + $0x6c0] sm:$0xff]
    %v260 = vld [vmem:[#allocation5 + $0x6c8] sm:$0xff]
    %v261 = vld [vmem:[#allocation5 + $0x6d0] sm:$0xff]
    %v262 = vld [vmem:[#allocation5 + $0x6d8] sm:$0xff]
    %v263 = vld [vmem:[#allocation5 + $0x6e0] sm:$0xff]
    %v264 = vld [vmem:[#allocation5 + $0x6e8] sm:$0xff]
    %v265 = vld [vmem:[#allocation5 + $0x6f0] sm:$0xff]
    %v266 = vld [vmem:[#allocation5 + $0x6f8] sm:$0xff]
    %v267 = vld [vmem:[#allocation5 + $0x700] sm:$0xff]
    %v268 = vld [vmem:[#allocation5 + $0x708] sm:$0xff]
    %v269 = vld [vmem:[#allocation5 + $0x710] sm:$0xff]
    %v270 = vld [vmem:[#allocation5 + $0x718] sm:$0xff]
    %v271 = vld [vmem:[#allocation5 + $0x720] sm:$0xff]
    %v272 = vld [vmem:[#allocation5 + $0x728] sm:$0xff]
    %v273 = vld [vmem:[#allocation5 + $0x730] sm:$0xff]
    %v274 = vld [vmem:[#allocation5 + $0x738] sm:$0xff]
    %v275 = vld [vmem:[#allocation5 + $0x740] sm:$0xff]
    %v276 = vld [vmem:[#allocation5 + $0x748] sm:$0xff]
    %v277 = vld [vmem:[#allocation5 + $0x750] sm:$0xff]
    %v278 = vld [vmem:[#allocation5 + $0x758] sm:$0xff]
    %v279 = vld [vmem:[#allocation5 + $0x760] sm:$0xff]
    %v280 = vld [vmem:[#allocation5 + $0x768] sm:$0xff]
    %v281 = vld [vmem:[#allocation5 + $0x770] sm:$0xff]
    %v282 = vld [vmem:[#allocation5 + $0x778] sm:$0xff]
    %v283 = vld [vmem:[#allocation5 + $0x780] sm:$0xff]
    %v284 = vld [vmem:[#allocation5 + $0x788] sm:$0xff]
    %v285 = vld [vmem:[#allocation5 + $0x790] sm:$0xff]
    %v286 = vld [vmem:[#allocation5 + $0x798] sm:$0xff]
    %v287 = vld [vmem:[#allocation5 + $0x7a0] sm:$0xff]
    %v288 = vld [vmem:[#allocation5 + $0x7a8] sm:$0xff]
    %v289 = vld [vmem:[#allocation5 + $0x7b0] sm:$0xff]
    %v290 = vld [vmem:[#allocation5 + $0x7b8] sm:$0xff]
    %v291 = vld [vmem:[#allocation5 + $0x7c0] sm:$0xff]
    %v292 = vld [vmem:[#allocation5 + $0x7c8] sm:$0xff]
    %v293 = vld [vmem:[#allocation5 + $0x7d0] sm:$0xff]
    %v294 = vld [vmem:[#allocation5 + $0x7d8] sm:$0xff]
    %v295 = vld [vmem:[#allocation5 + $0x7e0] sm:$0xff]
    %v296 = vld [vmem:[#allocation5 + $0x7e8] sm:$0xff]
    %v297 = vld [vmem:[#allocation5 + $0x7f0] sm:$0xff]
    %v298 = vld [vmem:[#allocation5 + $0x7f8] sm:$0xff]
    %v299 = vld [vmem:[%s2] sm:$0x1]
    %v302 = vlaneseq
    %v303 = vshrl.u32 %v302, 7
    %v304 = vsub.s32 0, %v303
    %v305 = vrot.slane %v41, %v304
    %v306 = vlaneseq
    %v307 = vshrl.u32 %v306, 7
    %v308 = vsub.s32 1, %v307
    %v309 = vrot.slane %v41, %v308
    %v310 = vlaneseq
    %v311 = vshrl.u32 %v310, 7
    %v312 = vsub.s32 2, %v311
    %v313 = vrot.slane %v41, %v312
    %v314 = vlaneseq
    %v315 = vshrl.u32 %v314, 7
    %v316 = vsub.s32 3, %v315
    %v317 = vrot.slane %v41, %v316
    %v318 = vlaneseq
    %v319 = vshrl.u32 %v318, 7
    %v320 = vsub.s32 4, %v319
    %v321 = vrot.slane %v41, %v320
    %v322 = vlaneseq
    %v323 = vshrl.u32 %v322, 7
    %v324 = vsub.s32 5, %v323
    %v325 = vrot.slane %v41, %v324
    %v326 = vlaneseq
    %v327 = vshrl.u32 %v326, 7
    %v328 = vsub.s32 6, %v327
    %v329 = vrot.slane %v41, %v328
    %v330 = vlaneseq
    %v331 = vshrl.u32 %v330, 7
    %v332 = vsub.s32 7, %v331
    %v333 = vrot.slane %v41, %v332
    %v334 = vlaneseq
    %v335 = vshrl.u32 %v334, 7
    %v336 = vsub.s32 0, %v335
    %v337 = vrot.slane %v42, %v336
    %v338 = vlaneseq
    %v339 = vshrl.u32 %v338, 7
    %v340 = vsub.s32 1, %v339
    %v341 = vrot.slane %v42, %v340
    %v342 = vlaneseq
    %v343 = vshrl.u32 %v342, 7
    %v344 = vsub.s32 2, %v343
    %v345 = vrot.slane %v42, %v344
    %v346 = vlaneseq
    %v347 = vshrl.u32 %v346, 7
    %v348 = vsub.s32 3, %v347
    %v349 = vrot.slane %v42, %v348
    %v350 = vlaneseq
    %v351 = vshrl.u32 %v350, 7
    %v352 = vsub.s32 4, %v351
    %v353 = vrot.slane %v42, %v352
    %v354 = vlaneseq
    %v355 = vshrl.u32 %v354, 7
    %v356 = vsub.s32 5, %v355
    %v357 = vrot.slane %v42, %v356
    %v358 = vlaneseq
    %v359 = vshrl.u32 %v358, 7
    %v360 = vsub.s32 6, %v359
    %v361 = vrot.slane %v42, %v360
    %v362 = vlaneseq
    %v363 = vshrl.u32 %v362, 7
    %v364 = vsub.s32 7, %v363
    %v365 = vrot.slane %v42, %v364
    %382 = vmatprep.subr.mxu0 0.0
    %383 = vmatpush1.msra.mxu0 %v43
    %384 = vmatprep.subr.mxu0 0.0
    %385 = vmatpush1.msra.mxu0 %v44
    %386 = vmatprep.subr.mxu0 0.0
    %387 = vmatpush1.msra.mxu0 %v45
    %388 = vmatprep.subr.mxu0 0.0
    %389 = vmatpush1.msra.mxu0 %v46
    %390 = vmatprep.subr.mxu0 0.0
    %391 = vmatpush1.msra.mxu0 %v47
    %392 = vmatprep.subr.mxu0 0.0
    %393 = vmatpush1.msra.mxu0 %v48
    %394 = vmatprep.subr.mxu0 0.0
    %395 = vmatpush1.msra.mxu0 %v49
    %396 = vmatprep.subr.mxu0 0.0
    %397 = vmatpush1.msra.mxu0 %v50
    %398 = vmatprep.subr.mxu0 0.0
    %399 = vmatpush1.msra.mxu0 %v51
    %400 = vmatprep.subr.mxu0 0.0
    %401 = vmatpush1.msra.mxu0 %v52
    %402 = vmatprep.subr.mxu0 0.0
    %403 = vmatpush1.msra.mxu0 %v53
    %404 = vmatprep.subr.mxu0 0.0
    %405 = vmatpush1.msra.mxu0 %v54
    %406 = vmatprep.subr.mxu0 0.0
    %407 = vmatpush1.msra.mxu0 %v55
    %408 = vmatprep.subr.mxu0 0.0
    %409 = vmatpush1.msra.mxu0 %v56
    %410 = vmatprep.subr.mxu0 0.0
    %411 = vmatpush1.msra.mxu0 %v57
    %412 = vmatprep.subr.mxu0 0.0
    %413 = vmatpush1.msra.mxu0 %v58
    %414 = vmatprep.subr.mxu0 0.0
    %415 = vmatpush1.msra.mxu0 %v59
    %416 = vmatprep.subr.mxu0 0.0
    %417 = vmatpush1.msra.mxu0 %v60
    %418 = vmatprep.subr.mxu0 0.0
    %419 = vmatpush1.msra.mxu0 %v61
    %420 = vmatprep.subr.mxu0 0.0
    %421 = vmatpush1.msra.mxu0 %v62
    %422 = vmatprep.subr.mxu0 0.0
    %423 = vmatpush1.msra.mxu0 %v63
    %424 = vmatprep.subr.mxu0 0.0
    %425 = vmatpush1.msra.mxu0 %v64
    %426 = vmatprep.subr.mxu0 0.0
    %427 = vmatpush1.msra.mxu0 %v65
    %428 = vmatprep.subr.mxu0 0.0
    %429 = vmatpush1.msra.mxu0 %v66
    %430 = vmatprep.subr.mxu0 0.0
    %431 = vmatpush1.msra.mxu0 %v67
    %432 = vmatprep.subr.mxu0 0.0
    %433 = vmatpush1.msra.mxu0 %v68
    %434 = vmatprep.subr.mxu0 0.0
    %435 = vmatpush1.msra.mxu0 %v69
    %436 = vmatprep.subr.mxu0 0.0
    %437 = vmatpush1.msra.mxu0 %v70
    %438 = vmatprep.subr.mxu0 0.0
    %439 = vmatpush1.msra.mxu0 %v71
    %440 = vmatprep.subr.mxu0 0.0
    %441 = vmatpush1.msra.mxu0 %v72
    %442 = vmatprep.subr.mxu0 0.0
    %443 = vmatpush1.msra.mxu0 %v73
    %444 = vmatprep.subr.mxu0 0.0
    %445 = vmatpush1.msra.mxu0 %v74
    %446 = vmatprep.mubr.f32.mxu0 %v309
    %447 = vmatmul.mubr.f32.gmra.mrb[0].mxu0 %v305
    %v448 = vpop.f32.mrb[0].mxu0
    %v449 = vadd.f32 %v299, %v448
    %v450 = vpop.f32.mrb[0].mxu0
    %451 = vdwg.mxu0
    %452 = vmatprep.subr.mxu0 0.0
    %453 = vmatpush1.msra.mxu0 %v75
    %454 = vmatprep.subr.mxu0 0.0
    %455 = vmatpush1.msra.mxu0 %v76
    %456 = vmatprep.subr.mxu0 0.0
    %457 = vmatpush1.msra.mxu0 %v77
    %458 = vmatprep.subr.mxu0 0.0
    %459 = vmatpush1.msra.mxu0 %v78
    %460 = vmatprep.subr.mxu0 0.0
    %461 = vmatpush1.msra.mxu0 %v79
    %462 = vmatprep.subr.mxu0 0.0
    %463 = vmatpush1.msra.mxu0 %v80
    %464 = vmatprep.subr.mxu0 0.0
    %465 = vmatpush1.msra.mxu0 %v81
    %466 = vmatprep.subr.mxu0 0.0
    %467 = vmatpush1.msra.mxu0 %v82
    %468 = vmatprep.subr.mxu0 0.0
    %469 = vmatpush1.msra.mxu0 %v83
    %470 = vmatprep.subr.mxu0 0.0
    %471 = vmatpush1.msra.mxu0 %v84
    %472 = vmatprep.subr.mxu0 0.0
    %473 = vmatpush1.msra.mxu0 %v85
    %474 = vmatprep.subr.mxu0 0.0
    %475 = vmatpush1.msra.mxu0 %v86
    %476 = vmatprep.subr.mxu0 0.0
    %477 = vmatpush1.msra.mxu0 %v87
    %478 = vmatprep.subr.mxu0 0.0
    %479 = vmatpush1.msra.mxu0 %v88
    %480 = vmatprep.subr.mxu0 0.0
    %481 = vmatpush1.msra.mxu0 %v89
    %482 = vmatprep.subr.mxu0 0.0
    %483 = vmatpush1.msra.mxu0 %v90
    %484 = vmatprep.subr.mxu0 0.0
    %485 = vmatpush1.msra.mxu0 %v91
    %486 = vmatprep.subr.mxu0 0.0
    %487 = vmatpush1.msra.mxu0 %v92
    %488 = vmatprep.subr.mxu0 0.0
    %489 = vmatpush1.msra.mxu0 %v93
    %490 = vmatprep.subr.mxu0 0.0
    %491 = vmatpush1.msra.mxu0 %v94
    %492 = vmatprep.subr.mxu0 0.0
    %493 = vmatpush1.msra.mxu0 %v95
    %494 = vmatprep.subr.mxu0 0.0
    %495 = vmatpush1.msra.mxu0 %v96
    %496 = vmatprep.subr.mxu0 0.0
    %497 = vmatpush1.msra.mxu0 %v97
    %498 = vmatprep.subr.mxu0 0.0
    %499 = vmatpush1.msra.mxu0 %v98
    %500 = vmatprep.subr.mxu0 0.0
    %501 = vmatpush1.msra.mxu0 %v99
    %502 = vmatprep.subr.mxu0 0.0
    %503 = vmatpush1.msra.mxu0 %v100
    %504 = vmatprep.subr.mxu0 0.0
    %505 = vmatpush1.msra.mxu0 %v101
    %506 = vmatprep.subr.mxu0 0.0
    %507 = vmatpush1.msra.mxu0 %v102
    %508 = vmatprep.subr.mxu0 0.0
    %509 = vmatpush1.msra.mxu0 %v103
    %510 = vmatprep.subr.mxu0 0.0
    %511 = vmatpush1.msra.mxu0 %v104
    %512 = vmatprep.subr.mxu0 0.0
    %513 = vmatpush1.msra.mxu0 %v105
    %514 = vmatprep.subr.mxu0 0.0
    %515 = vmatpush1.msra.mxu0 %v106
    %516 = vmatprep.mubr.f32.mxu0 %v317
    %517 = vmatmul.mubr.f32.gmra.mrb[0].mxu0 %v313
    %v518 = vpop.f32.mrb[0].mxu0
    %v519 = vadd.f32 %v449, %v518
    %v520 = vpop.f32.mrb[0].mxu0
    %521 = vdwg.mxu0
    %522 = vmatprep.subr.mxu0 0.0
    %523 = vmatpush1.msra.mxu0 %v107
    %524 = vmatprep.subr.mxu0 0.0
    %525 = vmatpush1.msra.mxu0 %v108
    %526 = vmatprep.subr.mxu0 0.0
    %527 = vmatpush1.msra.mxu0 %v109
    %528 = vmatprep.subr.mxu0 0.0
    %529 = vmatpush1.msra.mxu0 %v110
    %530 = vmatprep.subr.mxu0 0.0
    %531 = vmatpush1.msra.mxu0 %v111
    %532 = vmatprep.subr.mxu0 0.0
    %533 = vmatpush1.msra.mxu0 %v112
    %534 = vmatprep.subr.mxu0 0.0
    %535 = vmatpush1.msra.mxu0 %v113
    %536 = vmatprep.subr.mxu0 0.0
    %537 = vmatpush1.msra.mxu0 %v114
    %538 = vmatprep.subr.mxu0 0.0
    %539 = vmatpush1.msra.mxu0 %v115
    %540 = vmatprep.subr.mxu0 0.0
    %541 = vmatpush1.msra.mxu0 %v116
    %542 = vmatprep.subr.mxu0 0.0
    %543 = vmatpush1.msra.mxu0 %v117
    %544 = vmatprep.subr.mxu0 0.0
    %545 = vmatpush1.msra.mxu0 %v118
    %546 = vmatprep.subr.mxu0 0.0
    %547 = vmatpush1.msra.mxu0 %v119
    %548 = vmatprep.subr.mxu0 0.0
    %549 = vmatpush1.msra.mxu0 %v120
    %550 = vmatprep.subr.mxu0 0.0
    %551 = vmatpush1.msra.mxu0 %v121
    %552 = vmatprep.subr.mxu0 0.0
    %553 = vmatpush1.msra.mxu0 %v122
    %554 = vmatprep.subr.mxu0 0.0
    %555 = vmatpush1.msra.mxu0 %v123
    %556 = vmatprep.subr.mxu0 0.0
    %557 = vmatpush1.msra.mxu0 %v124
    %558 = vmatprep.subr.mxu0 0.0
    %559 = vmatpush1.msra.mxu0 %v125
    %560 = vmatprep.subr.mxu0 0.0
    %561 = vmatpush1.msra.mxu0 %v126
    %562 = vmatprep.subr.mxu0 0.0
    %563 = vmatpush1.msra.mxu0 %v127
    %564 = vmatprep.subr.mxu0 0.0
    %565 = vmatpush1.msra.mxu0 %v128
    %566 = vmatprep.subr.mxu0 0.0
    %567 = vmatpush1.msra.mxu0 %v129
    %568 = vmatprep.subr.mxu0 0.0
    %569 = vmatpush1.msra.mxu0 %v130
    %570 = vmatprep.subr.mxu0 0.0
    %571 = vmatpush1.msra.mxu0 %v131
    %572 = vmatprep.subr.mxu0 0.0
    %573 = vmatpush1.msra.mxu0 %v132
    %574 = vmatprep.subr.mxu0 0.0
    %575 = vmatpush1.msra.mxu0 %v133
    %576 = vmatprep.subr.mxu0 0.0
    %577 = vmatpush1.msra.mxu0 %v134
    %578 = vmatprep.subr.mxu0 0.0
    %579 = vmatpush1.msra.mxu0 %v135
    %580 = vmatprep.subr.mxu0 0.0
    %581 = vmatpush1.msra.mxu0 %v136
    %582 = vmatprep.subr.mxu0 0.0
    %583 = vmatpush1.msra.mxu0 %v137
    %584 = vmatprep.subr.mxu0 0.0
    %585 = vmatpush1.msra.mxu0 %v138
    %586 = vmatprep.mubr.f32.mxu0 %v325
    %587 = vmatmul.mubr.f32.gmra.mrb[0].mxu0 %v321
    %v588 = vpop.f32.mrb[0].mxu0
    %v589 = vadd.f32 %v519, %v588
    %v590 = vpop.f32.mrb[0].mxu0
    %591 = vdwg.mxu0
    %592 = vmatprep.subr.mxu0 0.0
    %593 = vmatpush1.msra.mxu0 %v139
    %594 = vmatprep.subr.mxu0 0.0
    %595 = vmatpush1.msra.mxu0 %v140
    %596 = vmatprep.subr.mxu0 0.0
    %597 = vmatpush1.msra.mxu0 %v141
    %598 = vmatprep.subr.mxu0 0.0
    %599 = vmatpush1.msra.mxu0 %v142
    %600 = vmatprep.subr.mxu0 0.0
    %601 = vmatpush1.msra.mxu0 %v143
    %602 = vmatprep.subr.mxu0 0.0
    %603 = vmatpush1.msra.mxu0 %v144
    %604 = vmatprep.subr.mxu0 0.0
    %605 = vmatpush1.msra.mxu0 %v145
    %606 = vmatprep.subr.mxu0 0.0
    %607 = vmatpush1.msra.mxu0 %v146
    %608 = vmatprep.subr.mxu0 0.0
    %609 = vmatpush1.msra.mxu0 %v147
    %610 = vmatprep.subr.mxu0 0.0
    %611 = vmatpush1.msra.mxu0 %v148
    %612 = vmatprep.subr.mxu0 0.0
    %613 = vmatpush1.msra.mxu0 %v149
    %614 = vmatprep.subr.mxu0 0.0
    %615 = vmatpush1.msra.mxu0 %v150
    %616 = vmatprep.subr.mxu0 0.0
    %617 = vmatpush1.msra.mxu0 %v151
    %618 = vmatprep.subr.mxu0 0.0
    %619 = vmatpush1.msra.mxu0 %v152
    %620 = vmatprep.subr.mxu0 0.0
    %621 = vmatpush1.msra.mxu0 %v153
    %622 = vmatprep.subr.mxu0 0.0
    %623 = vmatpush1.msra.mxu0 %v154
    %624 = vmatprep.subr.mxu0 0.0
    %625 = vmatpush1.msra.mxu0 %v155
    %626 = vmatprep.subr.mxu0 0.0
    %627 = vmatpush1.msra.mxu0 %v156
    %628 = vmatprep.subr.mxu0 0.0
    %629 = vmatpush1.msra.mxu0 %v157
    %630 = vmatprep.subr.mxu0 0.0
    %631 = vmatpush1.msra.mxu0 %v158
    %632 = vmatprep.subr.mxu0 0.0
    %633 = vmatpush1.msra.mxu0 %v159
    %634 = vmatprep.subr.mxu0 0.0
    %635 = vmatpush1.msra.mxu0 %v160
    %636 = vmatprep.subr.mxu0 0.0
    %637 = vmatpush1.msra.mxu0 %v161
    %638 = vmatprep.subr.mxu0 0.0
    %639 = vmatpush1.msra.mxu0 %v162
    %640 = vmatprep.subr.mxu0 0.0
    %641 = vmatpush1.msra.mxu0 %v163
    %642 = vmatprep.subr.mxu0 0.0
    %643 = vmatpush1.msra.mxu0 %v164
    %644 = vmatprep.subr.mxu0 0.0
    %645 = vmatpush1.msra.mxu0 %v165
    %646 = vmatprep.subr.mxu0 0.0
    %647 = vmatpush1.msra.mxu0 %v166
    %648 = vmatprep.subr.mxu0 0.0
    %649 = vmatpush1.msra.mxu0 %v167
    %650 = vmatprep.subr.mxu0 0.0
    %651 = vmatpush1.msra.mxu0 %v168
    %652 = vmatprep.subr.mxu0 0.0
    %653 = vmatpush1.msra.mxu0 %v169
    %654 = vmatprep.subr.mxu0 0.0
    %655 = vmatpush1.msra.mxu0 %v170
    %656 = vmatprep.mubr.f32.mxu0 %v333
    %657 = vmatmul.mubr.f32.gmra.mrb[0].mxu0 %v329
    %v658 = vpop.f32.mrb[0].mxu0
    %v659 = vadd.f32 %v589, %v658
    %v660 = vpop.f32.mrb[0].mxu0
    %661 = vdwg.mxu0
    %662 = vmatprep.subr.mxu0 0.0
    %663 = vmatpush1.msra.mxu0 %v171
    %664 = vmatprep.subr.mxu0 0.0
    %665 = vmatpush1.msra.mxu0 %v172
    %666 = vmatprep.subr.mxu0 0.0
    %667 = vmatpush1.msra.mxu0 %v173
    %668 = vmatprep.subr.mxu0 0.0
    %669 = vmatpush1.msra.mxu0 %v174
    %670 = vmatprep.subr.mxu0 0.0
    %671 = vmatpush1.msra.mxu0 %v175
    %672 = vmatprep.subr.mxu0 0.0
    %673 = vmatpush1.msra.mxu0 %v176
    %674 = vmatprep.subr.mxu0 0.0
    %675 = vmatpush1.msra.mxu0 %v177
    %676 = vmatprep.subr.mxu0 0.0
    %677 = vmatpush1.msra.mxu0 %v178
    %678 = vmatprep.subr.mxu0 0.0
    %679 = vmatpush1.msra.mxu0 %v179
    %680 = vmatprep.subr.mxu0 0.0
    %681 = vmatpush1.msra.mxu0 %v180
    %682 = vmatprep.subr.mxu0 0.0
    %683 = vmatpush1.msra.mxu0 %v181
    %684 = vmatprep.subr.mxu0 0.0
    %685 = vmatpush1.msra.mxu0 %v182
    %686 = vmatprep.subr.mxu0 0.0
    %687 = vmatpush1.msra.mxu0 %v183
    %688 = vmatprep.subr.mxu0 0.0
    %689 = vmatpush1.msra.mxu0 %v184
    %690 = vmatprep.subr.mxu0 0.0
    %691 = vmatpush1.msra.mxu0 %v185
    %692 = vmatprep.subr.mxu0 0.0
    %693 = vmatpush1.msra.mxu0 %v186
    %694 = vmatprep.subr.mxu0 0.0
    %695 = vmatpush1.msra.mxu0 %v187
    %696 = vmatprep.subr.mxu0 0.0
    %697 = vmatpush1.msra.mxu0 %v188
    %698 = vmatprep.subr.mxu0 0.0
    %699 = vmatpush1.msra.mxu0 %v189
    %700 = vmatprep.subr.mxu0 0.0
    %701 = vmatpush1.msra.mxu0 %v190
    %702 = vmatprep.subr.mxu0 0.0
    %703 = vmatpush1.msra.mxu0 %v191
    %704 = vmatprep.subr.mxu0 0.0
    %705 = vmatpush1.msra.mxu0 %v192
    %706 = vmatprep.subr.mxu0 0.0
    %707 = vmatpush1.msra.mxu0 %v193
    %708 = vmatprep.subr.mxu0 0.0
    %709 = vmatpush1.msra.mxu0 %v194
    %710 = vmatprep.subr.mxu0 0.0
    %711 = vmatpush1.msra.mxu0 %v195
    %712 = vmatprep.subr.mxu0 0.0
    %713 = vmatpush1.msra.mxu0 %v196
    %714 = vmatprep.subr.mxu0 0.0
    %715 = vmatpush1.msra.mxu0 %v197
    %716 = vmatprep.subr.mxu0 0.0
    %717 = vmatpush1.msra.mxu0 %v198
    %718 = vmatprep.subr.mxu0 0.0
    %719 = vmatpush1.msra.mxu0 %v199
    %720 = vmatprep.subr.mxu0 0.0
    %721 = vmatpush1.msra.mxu0 %v200
    %722 = vmatprep.subr.mxu0 0.0
    %723 = vmatpush1.msra.mxu0 %v201
    %724 = vmatprep.subr.mxu0 0.0
    %725 = vmatpush1.msra.mxu0 %v202
    %726 = vmatprep.mubr.f32.mxu0 %v341
    %727 = vmatmul.mubr.f32.gmra.mrb[0].mxu0 %v337
    %v728 = vpop.f32.mrb[0].mxu0
    %v729 = vadd.f32 %v659, %v728
    %v730 = vpop.f32.mrb[0].mxu0
    %731 = vdwg.mxu0
    %732 = vmatprep.subr.mxu0 0.0
    %733 = vmatpush1.msra.mxu0 %v203
    %734 = vmatprep.subr.mxu0 0.0
    %735 = vmatpush1.msra.mxu0 %v204
    %736 = vmatprep.subr.mxu0 0.0
    %737 = vmatpush1.msra.mxu0 %v205
    %738 = vmatprep.subr.mxu0 0.0
    %739 = vmatpush1.msra.mxu0 %v206
    %740 = vmatprep.subr.mxu0 0.0
    %741 = vmatpush1.msra.mxu0 %v207
    %742 = vmatprep.subr.mxu0 0.0
    %743 = vmatpush1.msra.mxu0 %v208
    %744 = vmatprep.subr.mxu0 0.0
    %745 = vmatpush1.msra.mxu0 %v209
    %746 = vmatprep.subr.mxu0 0.0
    %747 = vmatpush1.msra.mxu0 %v210
    %748 = vmatprep.subr.mxu0 0.0
    %749 = vmatpush1.msra.mxu0 %v211
    %750 = vmatprep.subr.mxu0 0.0
    %751 = vmatpush1.msra.mxu0 %v212
    %752 = vmatprep.subr.mxu0 0.0
    %753 = vmatpush1.msra.mxu0 %v213
    %754 = vmatprep.subr.mxu0 0.0
    %755 = vmatpush1.msra.mxu0 %v214
    %756 = vmatprep.subr.mxu0 0.0
    %757 = vmatpush1.msra.mxu0 %v215
    %758 = vmatprep.subr.mxu0 0.0
    %759 = vmatpush1.msra.mxu0 %v216
    %760 = vmatprep.subr.mxu0 0.0
    %761 = vmatpush1.msra.mxu0 %v217
    %762 = vmatprep.subr.mxu0 0.0
    %763 = vmatpush1.msra.mxu0 %v218
    %764 = vmatprep.subr.mxu0 0.0
    %765 = vmatpush1.msra.mxu0 %v219
    %766 = vmatprep.subr.mxu0 0.0
    %767 = vmatpush1.msra.mxu0 %v220
    %768 = vmatprep.subr.mxu0 0.0
    %769 = vmatpush1.msra.mxu0 %v221
    %770 = vmatprep.subr.mxu0 0.0
    %771 = vmatpush1.msra.mxu0 %v222
    %772 = vmatprep.subr.mxu0 0.0
    %773 = vmatpush1.msra.mxu0 %v223
    %774 = vmatprep.subr.mxu0 0.0
    %775 = vmatpush1.msra.mxu0 %v224
    %776 = vmatprep.subr.mxu0 0.0
    %777 = vmatpush1.msra.mxu0 %v225
    %778 = vmatprep.subr.mxu0 0.0
    %779 = vmatpush1.msra.mxu0 %v226
    %780 = vmatprep.subr.mxu0 0.0
    %781 = vmatpush1.msra.mxu0 %v227
    %782 = vmatprep.subr.mxu0 0.0
    %783 = vmatpush1.msra.mxu0 %v228
    %784 = vmatprep.subr.mxu0 0.0
    %785 = vmatpush1.msra.mxu0 %v229
    %786 = vmatprep.subr.mxu0 0.0
    %787 = vmatpush1.msra.mxu0 %v230
    %788 = vmatprep.subr.mxu0 0.0
    %789 = vmatpush1.msra.mxu0 %v231
    %790 = vmatprep.subr.mxu0 0.0
    %791 = vmatpush1.msra.mxu0 %v232
    %792 = vmatprep.subr.mxu0 0.0
    %793 = vmatpush1.msra.mxu0 %v233
    %794 = vmatprep.subr.mxu0 0.0
    %795 = vmatpush1.msra.mxu0 %v234
    %796 = vmatprep.mubr.f32.mxu0 %v349
    %797 = vmatmul.mubr.f32.gmra.mrb[0].mxu0 %v345
    %v798 = vpop.f32.mrb[0].mxu0
    %v799 = vadd.f32 %v729, %v798
    %v800 = vpop.f32.mrb[0].mxu0
    %801 = vdwg.mxu0
    %802 = vmatprep.subr.mxu0 0.0
    %803 = vmatpush1.msra.mxu0 %v235
    %804 = vmatprep.subr.mxu0 0.0
    %805 = vmatpush1.msra.mxu0 %v236
    %806 = vmatprep.subr.mxu0 0.0
    %807 = vmatpush1.msra.mxu0 %v237
    %808 = vmatprep.subr.mxu0 0.0
    %809 = vmatpush1.msra.mxu0 %v238
    %810 = vmatprep.subr.mxu0 0.0
    %811 = vmatpush1.msra.mxu0 %v239
    %812 = vmatprep.subr.mxu0 0.0
    %813 = vmatpush1.msra.mxu0 %v240
    %814 = vmatprep.subr.mxu0 0.0
    %815 = vmatpush1.msra.mxu0 %v241
    %816 = vmatprep.subr.mxu0 0.0
    %817 = vmatpush1.msra.mxu0 %v242
    %818 = vmatprep.subr.mxu0 0.0
    %819 = vmatpush1.msra.mxu0 %v243
    %820 = vmatprep.subr.mxu0 0.0
    %821 = vmatpush1.msra.mxu0 %v244
    %822 = vmatprep.subr.mxu0 0.0
    %823 = vmatpush1.msra.mxu0 %v245
    %824 = vmatprep.subr.mxu0 0.0
    %825 = vmatpush1.msra.mxu0 %v246
    %826 = vmatprep.subr.mxu0 0.0
    %827 = vmatpush1.msra.mxu0 %v247
    %828 = vmatprep.subr.mxu0 0.0
    %829 = vmatpush1.msra.mxu0 %v248
    %830 = vmatprep.subr.mxu0 0.0
    %831 = vmatpush1.msra.mxu0 %v249
    %832 = vmatprep.subr.mxu0 0.0
    %833 = vmatpush1.msra.mxu0 %v250
    %834 = vmatprep.subr.mxu0 0.0
    %835 = vmatpush1.msra.mxu0 %v251
    %836 = vmatprep.subr.mxu0 0.0
    %837 = vmatpush1.msra.mxu0 %v252
    %838 = vmatprep.subr.mxu0 0.0
    %839 = vmatpush1.msra.mxu0 %v253
    %840 = vmatprep.subr.mxu0 0.0
    %841 = vmatpush1.msra.mxu0 %v254
    %842 = vmatprep.subr.mxu0 0.0
    %843 = vmatpush1.msra.mxu0 %v255
    %844 = vmatprep.subr.mxu0 0.0
    %845 = vmatpush1.msra.mxu0 %v256
    %846 = vmatprep.subr.mxu0 0.0
    %847 = vmatpush1.msra.mxu0 %v257
    %848 = vmatprep.subr.mxu0 0.0
    %849 = vmatpush1.msra.mxu0 %v258
    %850 = vmatprep.subr.mxu0 0.0
    %851 = vmatpush1.msra.mxu0 %v259
    %852 = vmatprep.subr.mxu0 0.0
    %853 = vmatpush1.msra.mxu0 %v260
    %854 = vmatprep.subr.mxu0 0.0
    %855 = vmatpush1.msra.mxu0 %v261
    %856 = vmatprep.subr.mxu0 0.0
    %857 = vmatpush1.msra.mxu0 %v262
    %858 = vmatprep.subr.mxu0 0.0
    %859 = vmatpush1.msra.mxu0 %v263
    %860 = vmatprep.subr.mxu0 0.0
    %861 = vmatpush1.msra.mxu0 %v264
    %862 = vmatprep.subr.mxu0 0.0
    %863 = vmatpush1.msra.mxu0 %v265
    %864 = vmatprep.subr.mxu0 0.0
    %865 = vmatpush1.msra.mxu0 %v266
    %866 = vmatprep.mubr.f32.mxu0 %v357
    %867 = vmatmul.mubr.f32.gmra.mrb[0].mxu0 %v353
    %v868 = vpop.f32.mrb[0].mxu0
    %v869 = vadd.f32 %v799, %v868
    %v870 = vpop.f32.mrb[0].mxu0
    %871 = vdwg.mxu0
    %872 = vmatprep.subr.mxu0 0.0
    %873 = vmatpush1.msra.mxu0 %v267
    %874 = vmatprep.subr.mxu0 0.0
    %875 = vmatpush1.msra.mxu0 %v268
    %876 = vmatprep.subr.mxu0 0.0
    %877 = vmatpush1.msra.mxu0 %v269
    %878 = vmatprep.subr.mxu0 0.0
    %879 = vmatpush1.msra.mxu0 %v270
    %880 = vmatprep.subr.mxu0 0.0
    %881 = vmatpush1.msra.mxu0 %v271
    %882 = vmatprep.subr.mxu0 0.0
    %883 = vmatpush1.msra.mxu0 %v272
    %884 = vmatprep.subr.mxu0 0.0
    %885 = vmatpush1.msra.mxu0 %v273
    %886 = vmatprep.subr.mxu0 0.0
    %887 = vmatpush1.msra.mxu0 %v274
    %888 = vmatprep.subr.mxu0 0.0
    %889 = vmatpush1.msra.mxu0 %v275
    %890 = vmatprep.subr.mxu0 0.0
    %891 = vmatpush1.msra.mxu0 %v276
    %892 = vmatprep.subr.mxu0 0.0
    %893 = vmatpush1.msra.mxu0 %v277
    %894 = vmatprep.subr.mxu0 0.0
    %895 = vmatpush1.msra.mxu0 %v278
    %896 = vmatprep.subr.mxu0 0.0
    %897 = vmatpush1.msra.mxu0 %v279
    %898 = vmatprep.subr.mxu0 0.0
    %899 = vmatpush1.msra.mxu0 %v280
    %900 = vmatprep.subr.mxu0 0.0
    %901 = vmatpush1.msra.mxu0 %v281
    %902 = vmatprep.subr.mxu0 0.0
    %903 = vmatpush1.msra.mxu0 %v282
    %904 = vmatprep.subr.mxu0 0.0
    %905 = vmatpush1.msra.mxu0 %v283
    %906 = vmatprep.subr.mxu0 0.0
    %907 = vmatpush1.msra.mxu0 %v284
    %908 = vmatprep.subr.mxu0 0.0
    %909 = vmatpush1.msra.mxu0 %v285
    %910 = vmatprep.subr.mxu0 0.0
    %911 = vmatpush1.msra.mxu0 %v286
    %912 = vmatprep.subr.mxu0 0.0
    %913 = vmatpush1.msra.mxu0 %v287
    %914 = vmatprep.subr.mxu0 0.0
    %915 = vmatpush1.msra.mxu0 %v288
    %916 = vmatprep.subr.mxu0 0.0
    %917 = vmatpush1.msra.mxu0 %v289
    %918 = vmatprep.subr.mxu0 0.0
    %919 = vmatpush1.msra.mxu0 %v290
    %920 = vmatprep.subr.mxu0 0.0
    %921 = vmatpush1.msra.mxu0 %v291
    %922 = vmatprep.subr.mxu0 0.0
    %923 = vmatpush1.msra.mxu0 %v292
    %924 = vmatprep.subr.mxu0 0.0
    %925 = vmatpush1.msra.mxu0 %v293
    %926 = vmatprep.subr.mxu0 0.0
    %927 = vmatpush1.msra.mxu0 %v294
    %928 = vmatprep.subr.mxu0 0.0
    %929 = vmatpush1.msra.mxu0 %v295
    %930 = vmatprep.subr.mxu0 0.0
    %931 = vmatpush1.msra.mxu0 %v296
    %932 = vmatprep.subr.mxu0 0.0
    %933 = vmatpush1.msra.mxu0 %v297
    %934 = vmatprep.subr.mxu0 0.0
    %935 = vmatpush1.msra.mxu0 %v298
    %936 = vmatprep.mubr.f32.mxu0 %v365
    %937 = vmatmul.mubr.f32.gmra.mrb[0].mxu0 %v361
    %v938 = vpop.f32.mrb[0].mxu0
    %v939 = vadd.f32 %v869, %v938
    %v940 = vpop.f32.mrb[0].mxu0
    %941 = vdwg.mxu0
    %942 = vst [vmem:[#allocation7] sm:$0x1] %v939
    // Predicated region
    $region22: #{tpu_custom_call.1} parent=1 // pred_check
      _
    $region23: #{tpu_custom_call.1} parent=1 // pred_check_branch
      %944 = sbr.rel (0) target = $region25
    $region24: #{tpu_custom_call.1} parent=1 // pred_region
      %s946 = ssub.s32 16, 16
      %947 = vsyncadd [#allocation4], %s946
      %s949 = sshll.u32 [#allocation7], 4
      %s950 = int_to_ptr.vmem [resolvable:$true] %s949
      %952 = dma.vmem_to_hbm [thread:$0]  %s950, 16, %s3, [#allocation4]
    $region25: #{tpu_custom_call.1} parent=1 // pred_fallthru
      _
    // Predicated region
    $region26: #{tpu_custom_call.1} parent=1 // pred_check
      _
    $region27: #{tpu_custom_call.1} parent=1 // pred_check_branch
      %954 = sbr.rel (0) target = $region29
    $region28: #{tpu_custom_call.1} parent=1 // pred_region
      %955 = dma.done [#allocation4], 16
    $region29: #{tpu_custom_call.1} parent=1 // pred_fallthru
      _
    %956 = vsyncpa [#allocation3], 1
    %957 = vsyncpa [#allocation6], 1
    %958 = vsyncpa [#allocation4], 1

</llo_original>
